<compile_context>
chip_gen: v6e
topology: v6e:2x2x1
jax: 0.10.0
libtpu: 0.0.40
codegen_flags: <defaults>
</compile_context>

<pallas_src>
import functools
import math

import jax
import jax.numpy as jnp
from jax.experimental import pallas as pl
from jax.experimental.pallas import tpu as pltpu


def _choose_tile(n, max_tile=2048):
    """Largest lane tile <= max_tile that is a multiple of 128 and divides n
    (falls back to the full extent if no such divisor exists)."""
    if n <= max_tile:
        return n
    for t in range(max_tile - max_tile % 128, 127, -128):
        if n % t == 0:
            return t
    return n


# ---------------------------------------------------------------------------
# Kernel 1: global avg/max pooling + 1x1-conv MLPs + sigmoid -> channel gate.
# ---------------------------------------------------------------------------
def _gate_kernel(x_ref, w1a_ref, w2a_ref, w1m_ref, w2m_ref, gate_ref,
                 sum_acc, max_acc, *, inv_n):
    t = pl.program_id(1)
    x = x_ref[0]                                            # (C, TILE_N)

    @pl.when(t == 0)
    def _():
        sum_acc[...] = jnp.zeros_like(sum_acc)
        max_acc[...] = jnp.full_like(max_acc, -jnp.inf)

    # Per-channel partial reductions over the lane (spatial) axis.
    sum_acc[...] += jnp.sum(x, axis=1, keepdims=True)        # (C, 1)
    max_acc[...] = jnp.maximum(max_acc[...], jnp.max(x, axis=1, keepdims=True))

    @pl.when(t == pl.num_programs(1) - 1)
    def _():
        avg = sum_acc[...] * inv_n                           # (C, 1)
        mx = max_acc[...]                                    # (C, 1)
        # avg path: Conv1x1 (no bias) -> ReLU -> Conv1x1 (no bias)
        ha = jnp.maximum(
            jnp.dot(w1a_ref[...], avg, preferred_element_type=jnp.float32), 0.0)
        la = jnp.dot(w2a_ref[...], ha, preferred_element_type=jnp.float32)
        # max path
        hm = jnp.maximum(
            jnp.dot(w1m_ref[...], mx, preferred_element_type=jnp.float32), 0.0)
        lm = jnp.dot(w2m_ref[...], hm, preferred_element_type=jnp.float32)
        gate_ref[0] = jax.nn.sigmoid(la + lm)                # (C, 1)


# ---------------------------------------------------------------------------
# Kernel 2: y = x * gate  (gate broadcast over the lane/spatial axis).
# ---------------------------------------------------------------------------
def _scale_kernel(x_ref, gate_ref, out_ref):
    out_ref[0] = x_ref[0] * gate_ref[0]                      # (C, TILE) * (C, 1)


# ---------------------------------------------------------------------------
# Wrapper.
# ---------------------------------------------------------------------------
def channel_attention(x, params, *, max_tile=2048):
    B, C, H, W = x.shape
    N = H * W
    tile = _choose_tile(N, max_tile)
    nt = N // tile
    hid = params["w1_avg"].shape[0]

    x_flat = x.reshape(B, C, N).astype(jnp.float32)

    gate = pl.pallas_call(
        functools.partial(_gate_kernel, inv_n=1.0 / N),
        grid=(B, nt),
        in_specs=[
            pl.BlockSpec((1, C, tile), lambda b, t: (b, 0, t)),
            pl.BlockSpec((hid, C), lambda b, t: (0, 0)),
            pl.BlockSpec((C, hid), lambda b, t: (0, 0)),
            pl.BlockSpec((hid, C), lambda b, t: (0, 0)),
            pl.BlockSpec((C, hid), lambda b, t: (0, 0)),
        ],
        out_specs=pl.BlockSpec((1, C, 1), lambda b, t: (b, 0, 0)),
        out_shape=jax.ShapeDtypeStruct((B, C, 1), jnp.float32),
        scratch_shapes=[pltpu.VMEM((C, 1), jnp.float32),
                        pltpu.VMEM((C, 1), jnp.float32)],
        compiler_params=pltpu.CompilerParams(
            dimension_semantics=("parallel", "arbitrary")),
    )(x_flat, params["w1_avg"], params["w2_avg"],
      params["w1_max"], params["w2_max"])

    y = pl.pallas_call(
        _scale_kernel,
        grid=(B, nt),
        in_specs=[
            pl.BlockSpec((1, C, tile), lambda b, t: (b, 0, t)),
            pl.BlockSpec((1, C, 1), lambda b, t: (b, 0, 0)),
        ],
        out_specs=pl.BlockSpec((1, C, tile), lambda b, t: (b, 0, t)),
        out_shape=jax.ShapeDtypeStruct((B, C, N), jnp.float32),
        compiler_params=pltpu.CompilerParams(
            dimension_semantics=("parallel", "parallel")),
    )(x_flat, gate)

    return y.reshape(B, C, H, W)


# ---------------------------------------------------------------------------
# Parameter init (deterministic; Conv2d weights with bias=False, kernel 1x1).
# ---------------------------------------------------------------------------
def init_params(key, c_in, reduction_ratio=2):
    hid = max(c_in // reduction_ratio, 1)
    k1, k2, k3, k4 = jax.random.split(key, 4)
    s1 = 1.0 / math.sqrt(c_in)
    s2 = 1.0 / math.sqrt(hid)
    u = lambda kk, shp, s: jax.random.uniform(kk, shp, jnp.float32, -s, s)
    return dict(
        w1_avg=u(k1, (hid, c_in), s1),   # Conv2d(C, C//r, 1).weight squeezed
        w2_avg=u(k2, (c_in, hid), s2),   # Conv2d(C//r, C, 1).weight squeezed
        w1_max=u(k3, (hid, c_in), s1),
        w2_max=u(k4, (c_in, hid), s2),
    )


def _reference(x, p):
    avg = jnp.mean(x, axis=(2, 3))                           # (B, C)
    mx = jnp.max(x, axis=(2, 3))                             # (B, C)
    a = jnp.maximum(avg @ p["w1_avg"].T, 0.0) @ p["w2_avg"].T
    m = jnp.maximum(mx @ p["w1_max"].T, 0.0) @ p["w2_max"].T
    gate = jax.nn.sigmoid(a + m)
    return x * gate[:, :, None, None]


if __name__ == "__main__":
    B, C, H, W = 2, 4, 16, 16          # in_channels=4, reduction_ratio=2 -> hidden=2
    key = jax.random.PRNGKey(0)
    kx, kp = jax.random.split(key)
    x = jax.random.normal(kx, (B, C, H, W), jnp.float32)
    params = init_params(kp, C, reduction_ratio=2)

    out = channel_attention(x, params)
    out = jax.block_until_ready(out)
    assert out.shape == (B, C, H, W)

    ref = _reference(x, params)
    max_err = float(jnp.max(jnp.abs(out - ref)))
    assert jnp.allclose(out, ref, atol=1e-5, rtol=1e-5), max_err
    print("KERNEL_OK")
</pallas_src>

<mosaic_0001>
module attributes {stable_mosaic.version = 11 : i64} {
  func.func @_gate_kernel(%arg0: i32, %arg1: i32, %arg2: memref<1x4x256xf32, #tpu.memory_space<vmem>>, %arg3: memref<2x4xf32, #tpu.memory_space<vmem>>, %arg4: memref<4x2xf32, #tpu.memory_space<vmem>>, %arg5: memref<2x4xf32, #tpu.memory_space<vmem>>, %arg6: memref<4x2xf32, #tpu.memory_space<vmem>>, %arg7: memref<1x4x1xf32, #tpu.memory_space<vmem>>, %arg8: memref<4x1xf32, #tpu.memory_space<vmem>>, %arg9: memref<4x1xf32, #tpu.memory_space<vmem>>) attributes {dimension_semantics = [#tpu.dimension_semantics<parallel>, #tpu.dimension_semantics<arbitrary>], iteration_bounds = array<i64: 2, 1>, scalar_prefetch = 0 : i64, scratch_operands = 2 : i64, tpu.core_type = #tpu.core_type<tc>, window_params = [{transform_indices = @transform_0, window_bounds = array<i64: 1, 4, 256>}, {pipeline_mode = #tpu.pipeline_mode<synchronous>, transform_indices = @transform_1, window_bounds = array<i64: 2, 4>}, {pipeline_mode = #tpu.pipeline_mode<synchronous>, transform_indices = @transform_2, window_bounds = array<i64: 4, 2>}, {pipeline_mode = #tpu.pipeline_mode<synchronous>, transform_indices = @transform_3, window_bounds = array<i64: 2, 4>}, {pipeline_mode = #tpu.pipeline_mode<synchronous>, transform_indices = @transform_4, window_bounds = array<i64: 4, 2>}, {transform_indices = @transform_5, window_bounds = array<i64: 1, 4, 1>}]} {
    %c0 = arith.constant 0 : index
    %c0_0 = arith.constant 0 : index
    %c0_1 = arith.constant 0 : index
    %0 = vector.load %arg2[%c0, %c0_0, %c0_1] : memref<1x4x256xf32, #tpu.memory_space<vmem>>, vector<1x4x256xf32>
    %1 = vector.shape_cast %0 : vector<1x4x256xf32> to vector<4x256xf32>
    %c0_i32 = arith.constant 0 : i32
    %2 = arith.cmpi eq, %arg1, %c0_i32 : i32
    %3 = arith.extui %2 : i1 to i32
    %c0_i32_2 = arith.constant 0 : i32
    %4 = arith.cmpi ne, %3, %c0_i32_2 : i32
    scf.if %4 {
      %cst_14 = arith.constant 0.000000e+00 : f32
      %18 = vector.broadcast %cst_14 : f32 to vector<4x1xf32>
      %c0_15 = arith.constant 0 : index
      %c0_16 = arith.constant 0 : index
      %19 = vector.load %arg8[%c0_15, %c0_16] : memref<4x1xf32, #tpu.memory_space<vmem>>, vector<4x1xf32>
      tpu.vector_store %arg8[%c0_15, %c0_16], %18 {strides = array<i32>} : memref<4x1xf32, #tpu.memory_space<vmem>>, vector<4x1xf32>,
      %cst_17 = arith.constant 0xFF800000 : f32
      %20 = vector.broadcast %cst_17 : f32 to vector<4x1xf32>
      %c0_18 = arith.constant 0 : index
      %c0_19 = arith.constant 0 : index
      %21 = vector.load %arg9[%c0_18, %c0_19] : memref<4x1xf32, #tpu.memory_space<vmem>>, vector<4x1xf32>
      tpu.vector_store %arg9[%c0_18, %c0_19], %20 {strides = array<i32>} : memref<4x1xf32, #tpu.memory_space<vmem>>, vector<4x1xf32>,
    } else {
    }
    %c0_3 = arith.constant 0 : index
    %c0_4 = arith.constant 0 : index
    %5 = vector.load %arg8[%c0_3, %c0_4] : memref<4x1xf32, #tpu.memory_space<vmem>>, vector<4x1xf32>
    %cst = arith.constant dense<0.000000e+00> : vector<4xf32>
    %6 = vector.multi_reduction <add>, %1, %cst [1] : vector<4x256xf32> to vector<4xf32>
    %7 = vector.shape_cast %6 : vector<4xf32> to vector<4x1xf32>
    %8 = arith.addf %5, %7 : vector<4x1xf32>
    %c0_5 = arith.constant 0 : index
    %c0_6 = arith.constant 0 : index
    %9 = vector.load %arg8[%c0_5, %c0_6] : memref<4x1xf32, #tpu.memory_space<vmem>>, vector<4x1xf32>
    tpu.vector_store %arg8[%c0_5, %c0_6], %8 {strides = array<i32>} : memref<4x1xf32, #tpu.memory_space<vmem>>, vector<4x1xf32>,
    %c0_7 = arith.constant 0 : index
    %c0_8 = arith.constant 0 : index
    %10 = vector.load %arg9[%c0_7, %c0_8] : memref<4x1xf32, #tpu.memory_space<vmem>>, vector<4x1xf32>
    %cst_9 = arith.constant dense<0xFF800000> : vector<4xf32>
    %11 = vector.multi_reduction <maximumf>, %1, %cst_9 [1] : vector<4x256xf32> to vector<4xf32>
    %12 = vector.shape_cast %11 : vector<4xf32> to vector<4x1xf32>
    %13 = arith.maximumf %10, %12 : vector<4x1xf32>
    %c0_10 = arith.constant 0 : index
    %c0_11 = arith.constant 0 : index
    %14 = vector.load %arg9[%c0_10, %c0_11] : memref<4x1xf32, #tpu.memory_space<vmem>>, vector<4x1xf32>
    tpu.vector_store %arg9[%c0_10, %c0_11], %13 {strides = array<i32>} : memref<4x1xf32, #tpu.memory_space<vmem>>, vector<4x1xf32>,
    %c0_i32_12 = arith.constant 0 : i32
    %15 = arith.cmpi eq, %arg1, %c0_i32_12 : i32
    %16 = arith.extui %15 : i1 to i32
    %c0_i32_13 = arith.constant 0 : i32
    %17 = arith.cmpi ne, %16, %c0_i32_13 : i32
    scf.if %17 {
      %c0_14 = arith.constant 0 : index
      %c0_15 = arith.constant 0 : index
      %18 = vector.load %arg8[%c0_14, %c0_15] : memref<4x1xf32, #tpu.memory_space<vmem>>, vector<4x1xf32>
      %cst_16 = arith.constant 3.906250e-03 : f32
      %19 = vector.broadcast %cst_16 : f32 to vector<4x1xf32>
      %20 = arith.mulf %18, %19 : vector<4x1xf32>
      %c0_17 = arith.constant 0 : index
      %c0_18 = arith.constant 0 : index
      %21 = vector.load %arg9[%c0_17, %c0_18] : memref<4x1xf32, #tpu.memory_space<vmem>>, vector<4x1xf32>
      %c0_19 = arith.constant 0 : index
      %c0_20 = arith.constant 0 : index
      %22 = vector.load %arg3[%c0_19, %c0_20] : memref<2x4xf32, #tpu.memory_space<vmem>>, vector<2x4xf32>
      %cst_21 = arith.constant dense<0.000000e+00> : vector<2x1xf32>
      %23 = tpu.matmul %22, %20, %cst_21 {dimension_numbers = #tpu.dot_dimension_numbers<[1], [0], [0], [1], [0, 0, 1, 1], [], []>} : vector<2x4xf32>, vector<4x1xf32>, vector<2x1xf32> -> vector<2x1xf32>
      %cst_22 = arith.constant 0.000000e+00 : f32
      %24 = vector.broadcast %cst_22 : f32 to vector<2x1xf32>
      %25 = arith.maximumf %23, %24 : vector<2x1xf32>
      %c0_23 = arith.constant 0 : index
      %c0_24 = arith.constant 0 : index
      %26 = vector.load %arg4[%c0_23, %c0_24] : memref<4x2xf32, #tpu.memory_space<vmem>>, vector<4x2xf32>
      %cst_25 = arith.constant dense<0.000000e+00> : vector<4x1xf32>
      %27 = tpu.matmul %26, %25, %cst_25 {dimension_numbers = #tpu.dot_dimension_numbers<[1], [0], [0], [1], [0, 0, 1, 1], [], []>} : vector<4x2xf32>, vector<2x1xf32>, vector<4x1xf32> -> vector<4x1xf32>
      %c0_26 = arith.constant 0 : index
      %c0_27 = arith.constant 0 : index
      %28 = vector.load %arg5[%c0_26, %c0_27] : memref<2x4xf32, #tpu.memory_space<vmem>>, vector<2x4xf32>
      %cst_28 = arith.constant dense<0.000000e+00> : vector<2x1xf32>
      %29 = tpu.matmul %28, %21, %cst_28 {dimension_numbers = #tpu.dot_dimension_numbers<[1], [0], [0], [1], [0, 0, 1, 1], [], []>} : vector<2x4xf32>, vector<4x1xf32>, vector<2x1xf32> -> vector<2x1xf32>
      %cst_29 = arith.constant 0.000000e+00 : f32
      %30 = vector.broadcast %cst_29 : f32 to vector<2x1xf32>
      %31 = arith.maximumf %29, %30 : vector<2x1xf32>
      %c0_30 = arith.constant 0 : index
      %c0_31 = arith.constant 0 : index
      %32 = vector.load %arg6[%c0_30, %c0_31] : memref<4x2xf32, #tpu.memory_space<vmem>>, vector<4x2xf32>
      %cst_32 = arith.constant dense<0.000000e+00> : vector<4x1xf32>
      %33 = tpu.matmul %32, %31, %cst_32 {dimension_numbers = #tpu.dot_dimension_numbers<[1], [0], [0], [1], [0, 0, 1, 1], [], []>} : vector<4x2xf32>, vector<2x1xf32>, vector<4x1xf32> -> vector<4x1xf32>
      %34 = arith.addf %27, %33 : vector<4x1xf32>
      %35 = arith.negf %34 : vector<4x1xf32>
      %36 = math.exp %35 : vector<4x1xf32>
      %cst_33 = arith.constant 1.000000e+00 : f32
      %37 = vector.broadcast %cst_33 : f32 to vector<4x1xf32>
      %38 = arith.addf %37, %36 : vector<4x1xf32>
      %39 = arith.divf %37, %38 : vector<4x1xf32>
      %c0_34 = arith.constant 0 : index
      %c0_35 = arith.constant 0 : index
      %c0_36 = arith.constant 0 : index
      %40 = vector.load %arg7[%c0_34, %c0_35, %c0_36] : memref<1x4x1xf32, #tpu.memory_space<vmem>>, vector<1x4x1xf32>
      %41 = vector.shape_cast %40 : vector<1x4x1xf32> to vector<4x1xf32>
      %42 = vector.shape_cast %39 : vector<4x1xf32> to vector<1x4x1xf32>
      tpu.vector_store %arg7[%c0_34, %c0_35, %c0_36], %42 {strides = array<i32>} : memref<1x4x1xf32, #tpu.memory_space<vmem>>, vector<1x4x1xf32>,
    } else {
    }
    return
  }
  func.func @transform_0(%arg0: i32, %arg1: i32) -> (i32, i32, i32) {
    %c0_i32 = arith.constant 0 : i32
    %c0_i32_0 = arith.constant 0 : i32
    return %arg0, %c0_i32, %arg1 : i32, i32, i32
  }
  func.func @transform_1(%arg0: i32, %arg1: i32) -> (i32, i32) {
    %c0_i32 = arith.constant 0 : i32
    %c0_i32_0 = arith.constant 0 : i32
    %c0_i32_1 = arith.constant 0 : i32
    return %c0_i32, %c0_i32_0 : i32, i32
  }
  func.func @transform_2(%arg0: i32, %arg1: i32) -> (i32, i32) {
    %c0_i32 = arith.constant 0 : i32
    %c0_i32_0 = arith.constant 0 : i32
    %c0_i32_1 = arith.constant 0 : i32
    return %c0_i32, %c0_i32_0 : i32, i32
  }
  func.func @transform_3(%arg0: i32, %arg1: i32) -> (i32, i32) {
    %c0_i32 = arith.constant 0 : i32
    %c0_i32_0 = arith.constant 0 : i32
    %c0_i32_1 = arith.constant 0 : i32
    return %c0_i32, %c0_i32_0 : i32, i32
  }
  func.func @transform_4(%arg0: i32, %arg1: i32) -> (i32, i32) {
    %c0_i32 = arith.constant 0 : i32
    %c0_i32_0 = arith.constant 0 : i32
    %c0_i32_1 = arith.constant 0 : i32
    return %c0_i32, %c0_i32_0 : i32, i32
  }
  func.func @transform_5(%arg0: i32, %arg1: i32) -> (i32, i32, i32) {
    %c0_i32 = arith.constant 0 : i32
    %c0_i32_0 = arith.constant 0 : i32
    %c0_i32_1 = arith.constant 0 : i32
    return %arg0, %c0_i32, %c0_i32_0 : i32, i32, i32
  }
}

</mosaic_0001>

<llo_original>
// kernel: tpu_custom_call.1
$region0: #{tpu_custom_call.1}
  #allocation0 [shape = 'u32[]', space=smem, size = 0x4, offset = 0x4, fixed_abs, tag = 'smem constant byte address 0x4 - core index']
  #allocation1 [shape = 'u32[144,128]{1,0:T(1,128)}', space=vmem, size = 0x12000, scoped, tag = 'internal scratch']
  #allocation2 [shape = 'f32[4,1]{1,0:T(4,128)}', space=vmem, size = 0x800, scoped, tag = 'scratch operand']
  #allocation3 [shape = 'f32[4,1]{1,0:T(4,128)}', space=vmem, size = 0x800, scoped, tag = 'scratch operand']
  %s0 = inlined_call_operand.hbm [shape: f32[2,4,256], index: 0, kind: input, shape index: {}]
  %s1 = inlined_call_operand.vmem [shape: f32[2,4], index: 1, kind: input, shape index: {}]
  %s2 = inlined_call_operand.vmem [shape: f32[4,2], index: 2, kind: input, shape index: {}]
  %s3 = inlined_call_operand.vmem [shape: f32[2,4], index: 3, kind: input, shape index: {}]
  %s4 = inlined_call_operand.vmem [shape: f32[4,2], index: 4, kind: input, shape index: {}]
  %s5 = inlined_call_operand.vmem [shape: f32[2,4,1], index: 5, kind: output, shape index: {}]
  %s6 = sld [smem:[#allocation0]]
  $region65: #{tpu_custom_call.1} parent=0
    _
  %s8 = ssub.s32 1, %s6
  %s9 = scalar_select 0, %s8, %s6
  $region1: #{tpu_custom_call.1} parent=0
    #allocation4 [shape = 'u8[8192]{0}', space=vmem, size = 0x2000, scoped, tag = 'input window, operand 0']
    #allocation5 [shape = 's32[2]{0}', space=sflag, size = 0x8, scoped, tag = 'scoped memory for tpu_custom_call.1']
    %10 = vsyncpa [#allocation5], 0
    %s11 = scalar_lea.sflag [#allocation5], 1
    %12 = vsyncpa %s11, 0
    loop: start=0, step=1, limit=4
    $region2: #{tpu_custom_call.1} parent=1 // loop_pre_header
      _
    $region3: #{tpu_custom_call.1} parent=1 // loop_header
      %s14 = sphi 0, %s18
      %p15 = scmp.ge.s32.totalorder %s14, 4
      %s21 = sphi 0, %s33
      %s22 = sphi 0, %s29
      %s23 = sphi 0, %s21
      %s24 = sphi 0, %s22
      %s25 = sphi 0, %s23
      %s26 = sphi 0, %s24
      %s38 = sphi 0, %s40
      %s41 = sphi 0, %s38
      %s42 = sphi 0, %s41
      %s58 = sphi 0, %s42
      %s62 = sphi 0, %s62
      %s64 = sphi 0, %s62
      %s65 = sphi 0, %s64
      %s79 = sphi 0, %s65
      %s83 = sphi 0, %s83
      %s85 = sphi 0, %s83
      %s86 = sphi 0, %s85
      %s100 = sphi 0, %s86
      %s104 = sphi 0, %s104
      %s106 = sphi 0, %s104
      %s107 = sphi 0, %s106
      %s121 = sphi 0, %s107
      %s125 = sphi 0, %s125
      %s127 = sphi 0, %s125
      %s128 = sphi 0, %s127
      %s142 = sphi 0, %s128
      %s148 = sphi 0, %s150
      %s151 = sphi 0, %s148
      %s152 = sphi 0, %s151
      %s168 = sphi 0, %s152
    $region4: #{tpu_custom_call.1} parent=1 // loop_header_branch
      %17 = sbr.rel (%p15) target = $region8
    $region5: #{tpu_custom_call.1} parent=1 // loop_body
      %s19 = ssub.s32 %s14, 1
      %s20 = ssub.s32 %s14, 2
      %s27 = sadd.s32 1, %s22
      %p28 = scmp.ge.s32.totalorder %s27, 1
      %s29 = scalar_select %p28, 0, %s27
      %s30 = sadd.s32 1, %s21
      %s31 = scalar_select %p28, %s30, %s21
      %p32 = scmp.ge.s32.totalorder %s31, 2
      %s33 = scalar_select %p32, 0, %s31
      %s34 = ssub.s32 %s21, %s33
      %s35 = ssub.s32 %s22, %s29
      %s36 = sor.u32 %s34, %s35
      %p37 = scmp.eq.s32.totalorder %s36, 0
      %s39 = sadd.s32 %s38, 1
      %s40 = scalar_select %p37, %s38, %s39
      %p43 = pneg %p37
      %p44 = scmp.eq.s32.totalorder %s14, 1
      %p45 = por %p43, %p44
      %p46 = scmp.ne.s32.totalorder %s38, %s41
      %p47 = scmp.eq.s32.totalorder %s14, 0
      %p48 = por %p46, %p47
      %p49 = scmp.ne.s32.totalorder %s38, %s41
      %p50 = scmp.eq.s32.totalorder %s19, 1
      %p51 = por %p49, %p50
      %p52 = scmp.ne.s32.totalorder %s41, %s42
      %p53 = scmp.eq.s32.totalorder %s19, 0
      %p54 = por %p52, %p53
      %p55 = scmp.ne.s32.totalorder %s41, %s42
      %p56 = scmp.eq.s32.totalorder %s20, 1
      %p57 = por %p55, %p56
      %p59 = scmp.ne.s32.totalorder %s42, %s58
      %p60 = scmp.eq.s32.totalorder %s20, 0
      %p61 = por %p59, %p60
      %s63 = sadd.s32 %s62, 1
      %p66 = scmp.eq.s32.totalorder %s14, 1
      %p67 = scmp.ne.s32.totalorder %s62, %s64
      %p68 = scmp.eq.s32.totalorder %s14, 0
      %p69 = por %p67, %p68
      %p70 = scmp.ne.s32.totalorder %s62, %s64
      %p71 = scmp.eq.s32.totalorder %s19, 1
      %p72 = por %p70, %p71
      %p73 = scmp.ne.s32.totalorder %s64, %s65
      %p74 = scmp.eq.s32.totalorder %s19, 0
      %p75 = por %p73, %p74
      %p76 = scmp.ne.s32.totalorder %s64, %s65
      %p77 = scmp.eq.s32.totalorder %s20, 1
      %p78 = por %p76, %p77
      %p80 = scmp.ne.s32.totalorder %s65, %s79
      %p81 = scmp.eq.s32.totalorder %s20, 0
      %p82 = por %p80, %p81
      %s84 = sadd.s32 %s83, 1
      %p87 = scmp.eq.s32.totalorder %s14, 1
      %p88 = scmp.ne.s32.totalorder %s83, %s85
      %p89 = scmp.eq.s32.totalorder %s14, 0
      %p90 = por %p88, %p89
      %p91 = scmp.ne.s32.totalorder %s83, %s85
      %p92 = scmp.eq.s32.totalorder %s19, 1
      %p93 = por %p91, %p92
      %p94 = scmp.ne.s32.totalorder %s85, %s86
      %p95 = scmp.eq.s32.totalorder %s19, 0
      %p96 = por %p94, %p95
      %p97 = scmp.ne.s32.totalorder %s85, %s86
      %p98 = scmp.eq.s32.totalorder %s20, 1
      %p99 = por %p97, %p98
      %p101 = scmp.ne.s32.totalorder %s86, %s100
      %p102 = scmp.eq.s32.totalorder %s20, 0
      %p103 = por %p101, %p102
      %s105 = sadd.s32 %s104, 1
      %p108 = scmp.eq.s32.totalorder %s14, 1
      %p109 = scmp.ne.s32.totalorder %s104, %s106
      %p110 = scmp.eq.s32.totalorder %s14, 0
      %p111 = por %p109, %p110
      %p112 = scmp.ne.s32.totalorder %s104, %s106
      %p113 = scmp.eq.s32.totalorder %s19, 1
      %p114 = por %p112, %p113
      %p115 = scmp.ne.s32.totalorder %s106, %s107
      %p116 = scmp.eq.s32.totalorder %s19, 0
      %p117 = por %p115, %p116
      %p118 = scmp.ne.s32.totalorder %s106, %s107
      %p119 = scmp.eq.s32.totalorder %s20, 1
      %p120 = por %p118, %p119
      %p122 = scmp.ne.s32.totalorder %s107, %s121
      %p123 = scmp.eq.s32.totalorder %s20, 0
      %p124 = por %p122, %p123
      %s126 = sadd.s32 %s125, 1
      %p129 = scmp.eq.s32.totalorder %s14, 1
      %p130 = scmp.ne.s32.totalorder %s125, %s127
      %p131 = scmp.eq.s32.totalorder %s14, 0
      %p132 = por %p130, %p131
      %p133 = scmp.ne.s32.totalorder %s125, %s127
      %p134 = scmp.eq.s32.totalorder %s19, 1
      %p135 = por %p133, %p134
      %p136 = scmp.ne.s32.totalorder %s127, %s128
      %p137 = scmp.eq.s32.totalorder %s19, 0
      %p138 = por %p136, %p137
      %p139 = scmp.ne.s32.totalorder %s127, %s128
      %p140 = scmp.eq.s32.totalorder %s20, 1
      %p141 = por %p139, %p140
      %p143 = scmp.ne.s32.totalorder %s128, %s142
      %p144 = scmp.eq.s32.totalorder %s20, 0
      %p145 = por %p143, %p144
      %s146 = ssub.s32 %s21, %s33
      %p147 = scmp.eq.s32.totalorder %s146, 0
      %s149 = sadd.s32 %s148, 1
      %s150 = scalar_select %p147, %s148, %s149
      %p153 = pneg %p147
      %p154 = scmp.eq.s32.totalorder %s14, 1
      %p155 = por %p153, %p154
      %p156 = scmp.ne.s32.totalorder %s148, %s151
      %p157 = scmp.eq.s32.totalorder %s14, 0
      %p158 = por %p156, %p157
      %p159 = scmp.ne.s32.totalorder %s148, %s151
      %p160 = scmp.eq.s32.totalorder %s19, 1
      %p161 = por %p159, %p160
      %p162 = scmp.ne.s32.totalorder %s151, %s152
      %p163 = scmp.eq.s32.totalorder %s19, 0
      %p164 = por %p162, %p163
      %p165 = scmp.ne.s32.totalorder %s151, %s152
      %p166 = scmp.eq.s32.totalorder %s20, 1
      %p167 = por %p165, %p166
      %p169 = scmp.ne.s32.totalorder %s152, %s168
      %p170 = scmp.eq.s32.totalorder %s20, 0
      %p171 = por %p169, %p170
      %p172 = scmp.le.s32.totalorder 1, %s14
      %p173 = scmp.lt.s32.totalorder %s14, 3
      %p174 = pnand %p172, %p173
      %p175 = pneg %p174
      // Predicated region
      $region9: #{tpu_custom_call.1} parent=5 // pred_check
        _
      $region10: #{tpu_custom_call.1} parent=5 // pred_check_branch
        %177 = sbr.rel (%p174) target = $region12
      $region11: #{tpu_custom_call.1} parent=5 // pred_region
        %s178 = ssub.s32 %s14, 1
        // Predicated region
        $region13: #{tpu_custom_call.1} parent=11 // pred_check
          %p179 = pneg %p75
        $region14: #{tpu_custom_call.1} parent=11 // pred_check_branch
          %181 = sbr.rel (%p179) target = $region16
        $region15: #{tpu_custom_call.1} parent=11 // pred_region
          _
        $region16: #{tpu_custom_call.1} parent=11 // pred_fallthru
          _
        // Predicated region
        $region17: #{tpu_custom_call.1} parent=11 // pred_check
          %p182 = pneg %p96
        $region18: #{tpu_custom_call.1} parent=11 // pred_check_branch
          %184 = sbr.rel (%p182) target = $region20
        $region19: #{tpu_custom_call.1} parent=11 // pred_region
          _
        $region20: #{tpu_custom_call.1} parent=11 // pred_fallthru
          _
        // Predicated region
        $region21: #{tpu_custom_call.1} parent=11 // pred_check
          %p185 = pneg %p117
        $region22: #{tpu_custom_call.1} parent=11 // pred_check_branch
          %187 = sbr.rel (%p185) target = $region24
        $region23: #{tpu_custom_call.1} parent=11 // pred_region
          _
        $region24: #{tpu_custom_call.1} parent=11 // pred_fallthru
          _
        // Predicated region
        $region25: #{tpu_custom_call.1} parent=11 // pred_check
          %p188 = pneg %p138
        $region26: #{tpu_custom_call.1} parent=11 // pred_check_branch
          %190 = sbr.rel (%p188) target = $region28
        $region27: #{tpu_custom_call.1} parent=11 // pred_region
          _
        $region28: #{tpu_custom_call.1} parent=11 // pred_fallthru
          _
      $region12: #{tpu_custom_call.1} parent=5 // pred_fallthru
        _
      %p191 = scmp.lt.s32.totalorder %s14, 2
      // Predicated region
      $region29: #{tpu_custom_call.1} parent=5 // pred_check
        %p192 = pneg %p191
      $region30: #{tpu_custom_call.1} parent=5 // pred_check_branch
        %194 = sbr.rel (%p192) target = $region32
      $region31: #{tpu_custom_call.1} parent=5 // pred_region
        // Predicated region
        $region33: #{tpu_custom_call.1} parent=31 // pred_check
          %p195 = pneg %p48
        $region34: #{tpu_custom_call.1} parent=31 // pred_check_branch
          %197 = sbr.rel (%p195) target = $region36
        $region35: #{tpu_custom_call.1} parent=31 // pred_region
          %s198 = sand.u32 %s38, 1
          %s199 = scalar_lea.sflag [#allocation5], %s198
          %s200 = sand.u32 %s38, 1
          %s201 = smul.addr %s200, 8
          %s202 = scalar_lea.vmem [#allocation4], %s201
          %s203 = smul.u32 2, %s22
          %s205 = ssub.s32 128, 128
          %206 = vsyncadd %s199, %s205
          %s207 = smul.addr %s21, 2
          %s208 = sadd.s32 %s203, %s207
          %s209 = smul.addr %s208, 64
          %s210 = scalar_lea.hbm %s0, %s209
          %s212 = sshll.u32 %s202, 4
          %s213 = int_to_ptr.vmem [resolvable:$true] %s212
          %215 = dma.hbm_to_vmem [thread:$0]  %s210, 128, %s213, %s199
        $region36: #{tpu_custom_call.1} parent=31 // pred_fallthru
          _
      $region32: #{tpu_custom_call.1} parent=5 // pred_fallthru
        _
      %p216 = scmp.le.s32.totalorder 1, %s14
      %p217 = scmp.lt.s32.totalorder %s14, 3
      %p218 = pnand %p216, %p217
      %p219 = pneg %p218
      // Predicated region
      $region37: #{tpu_custom_call.1} parent=5 // pred_check
        _
      $region38: #{tpu_custom_call.1} parent=5 // pred_check_branch
        %221 = sbr.rel (%p218) target = $region40
      $region39: #{tpu_custom_call.1} parent=5 // pred_region
        %s222 = ssub.s32 %s14, 1
        %s223 = sand.u32 %s41, 1
        %s224 = scalar_lea.sflag [#allocation5], %s223
        %s225 = sand.u32 %s41, 1
        %s226 = smul.addr %s225, 8
        %s227 = scalar_lea.vmem [#allocation4], %s226
        // Predicated region
        $region41: #{tpu_custom_call.1} parent=39 // pred_check
          %p228 = pneg %p54
        $region42: #{tpu_custom_call.1} parent=39 // pred_check_branch
          %230 = sbr.rel (%p228) target = $region44
        $region43: #{tpu_custom_call.1} parent=39 // pred_region
          %231 = dma.done %s224, 128
        $region44: #{tpu_custom_call.1} parent=39 // pred_fallthru
          _
        %s232 = sand.u32 %s41, 1
        %s233 = scalar_lea.sflag [#allocation5], %s232
        %s234 = sand.u32 %s41, 1
        %s235 = smul.addr %s234, 8
        %s236 = scalar_lea.vmem [#allocation4], %s235
        %p237 = pneg %p54
        %p238 = pneg %p51
        %p239 = pneg %p75
        %p240 = pneg %p72
        %p241 = pneg %p96
        %p242 = pneg %p93
        %p243 = pneg %p117
        %p244 = pneg %p114
        %p245 = pneg %p138
        %p246 = pneg %p135
        %p247 = pneg %p164
        %p248 = pneg %p161
        %p249 = scmp.lt.s32.totalorder %s23, 1
        %s250 = scalar_select %p249, %s23, 1
        %s251 = smul.addr %s250, 4
        %s252 = scalar_lea.vmem %s5, %s251
        %s253 = smul.u32 2, %s24
        %p254 = scmp.lt.s32.totalorder %s23, 1
        %s255 = scalar_select %p254, %s23, 1
        %s256 = smul.addr %s255, 4
        %s257 = scalar_lea.vmem %s5, %s256
        %v258 = vld [vmem:[%s227] sm:$0xff]
        %p259 = scmp.eq.s32.totalorder %s24, 0
        // Predicated region
        $region45: #{tpu_custom_call.1} parent=39 // pred_check
          %p260 = pneg %p259
        $region46: #{tpu_custom_call.1} parent=39 // pred_check_branch
          %262 = sbr.rel (%p260) target = $region48
        $region47: #{tpu_custom_call.1} parent=39 // pred_region
          %vm263 = vcmask 3072
          %264 = vst.msk [vmem:[#allocation2] sm:$0xf] %vm263, 0.0
          %265 = vst.msk [vmem:[#allocation3] sm:$0xf] %vm263, -inf
        $region48: #{tpu_custom_call.1} parent=39 // pred_fallthru
          _
        %v266 = vld [vmem:[#allocation2] sm:$0xf]
        %v268 = vcombine.high %v258, %v258
        %vm270 = vcmask 1043456
        %v271 = vsel %vm270, %v258, 0.0
        %v272 = vsel %vm270, %v268, 0.0
        %v273 = vadd.f32 %v271, %v272
        %274 = vadd.xlane.f32.xlu0 %v273
        %v275 = vpop.xlane.xlu0 %274
        %v276 = vadd.f32 %v266, %v275
        %vm277 = vcmask 3072
        %278 = vst.msk [vmem:[#allocation2] sm:$0xf] %vm277, %v276
        %v279 = vld [vmem:[#allocation3] sm:$0xf]
        %v280 = vsel %vm270, %v258, -inf
        %v281 = vsel %vm270, %v268, -inf
        %v282 = vmax.f32 %v280, %v281
        %283 = vmax.xlane.f32.xlu0 %v282
        %v284 = vpop.xlane.xlu0 %283
        %v285 = vmax.f32 %v279, %v284
        %286 = vst.msk [vmem:[#allocation3] sm:$0xf] %vm277, %v285
        // Predicated region
        $region49: #{tpu_custom_call.1} parent=39 // pred_check
          %p287 = pneg %p259
        $region50: #{tpu_custom_call.1} parent=39 // pred_check_branch
          %289 = sbr.rel (%p287) target = $region52
        $region51: #{tpu_custom_call.1} parent=39 // pred_region
          %v290 = vld [vmem:[#allocation2] sm:$0xf]
          %v291 = vmul.f32 %v290, 0.00390625
          %v292 = vld [vmem:[#allocation3] sm:$0xf]
          %v293 = vld [vmem:[%s1] sm:$0x3]
          %vm294 = vcmask 31744
          %v296 = vsel %vm294, %v293, 0
          %v299 = vsel %vm270, %v291, 0
          %301 = vmatprep.subr.mxu0 0.0
          %302 = vmatpush1.msra.mxu0 0.0
          %303 = vmatprep.subr.mxu0 0.0
          %304 = vmatpush1.msra.mxu0 0.0
          %305 = vmatprep.subr.mxu0 0.0
          %306 = vmatpush1.msra.mxu0 0.0
          %307 = vmatprep.subr.mxu0 0.0
          %308 = vmatpush1.msra.mxu0 0.0
          %309 = vmatprep.subr.mxu0 0.0
          %310 = vmatpush1.msra.mxu0 0.0
          %311 = vmatprep.subr.mxu0 0.0
          %312 = vmatpush1.msra.mxu0 0.0
          %313 = vmatprep.subr.mxu0 0.0
          %314 = vmatpush1.msra.mxu0 0.0
          %315 = vmatprep.subr.mxu0 0.0
          %316 = vmatpush1.msra.mxu0 0.0
          %317 = vmatprep.subr.mxu0 0.0
          %318 = vmatpush1.msra.mxu0 0.0
          %319 = vmatprep.subr.mxu0 0.0
          %320 = vmatpush1.msra.mxu0 0.0
          %321 = vmatprep.subr.mxu0 0.0
          %322 = vmatpush1.msra.mxu0 0.0
          %323 = vmatprep.subr.mxu0 0.0
          %324 = vmatpush1.msra.mxu0 0.0
          %325 = vmatprep.subr.mxu0 0.0
          %326 = vmatpush1.msra.mxu0 0.0
          %327 = vmatprep.subr.mxu0 0.0
          %328 = vmatpush1.msra.mxu0 0.0
          %329 = vmatprep.subr.mxu0 0.0
          %330 = vmatpush1.msra.mxu0 0.0
          %331 = vmatprep.subr.mxu0 0.0
          %332 = vmatpush1.msra.mxu0 %v299
          %333 = vmatprep.subr.mxu0 0.0
          %334 = vmatpush2.msra.mxu0 0.0
          %335 = vmatprep.subr.mxu0 0.0
          %336 = vmatpush2.msra.mxu0 0.0
          %337 = vmatprep.subr.mxu0 0.0
          %338 = vmatpush2.msra.mxu0 0.0
          %339 = vmatprep.subr.mxu0 0.0
          %340 = vmatpush2.msra.mxu0 0.0
          %341 = vmatprep.subr.mxu0 0.0
          %342 = vmatpush2.msra.mxu0 0.0
          %343 = vmatprep.subr.mxu0 0.0
          %344 = vmatpush2.msra.mxu0 0.0
          %345 = vmatprep.subr.mxu0 0.0
          %346 = vmatpush2.msra.mxu0 0.0
          %347 = vmatprep.subr.mxu0 0.0
          %348 = vmatpush2.msra.mxu0 0.0
          %349 = vmatprep.subr.mxu0 0.0
          %350 = vmatpush2.msra.mxu0 0.0
          %351 = vmatprep.subr.mxu0 0.0
          %352 = vmatpush2.msra.mxu0 0.0
          %353 = vmatprep.subr.mxu0 0.0
          %354 = vmatpush2.msra.mxu0 0.0
          %355 = vmatprep.subr.mxu0 0.0
          %356 = vmatpush2.msra.mxu0 0.0
          %357 = vmatprep.subr.mxu0 0.0
          %358 = vmatpush2.msra.mxu0 0.0
          %359 = vmatprep.subr.mxu0 0.0
          %360 = vmatpush2.msra.mxu0 0.0
          %361 = vmatprep.subr.mxu0 0.0
          %362 = vmatpush2.msra.mxu0 0.0
          %363 = vmatprep.subr.mxu0 0.0
          %364 = vmatpush2.msra.mxu0 0.0
          %365 = vmatprep.mubr.f32.mxu0 0.0
          %366 = vmatmul.mubr.f32.gmra.mxu0 %v296
          %v367 = vpop.f32.mrf.mxu0
          %v368 = vadd.f32 0.0, %v367
          %v369 = vpop.f32.mrf.mxu0
          %370 = vdwg.mxu0
          %v371 = vmax.f32 %v368, 0.0
          %v372 = vld [vmem:[%s2] sm:$0xf]
          %v373 = vld [vmem:[%s3] sm:$0x3]
          %v375 = vsel %vm294, %v373, 0
          %v378 = vsel %vm270, %v292, 0
          %380 = vmatprep.subr.mxu0 0.0
          %381 = vmatpush1.msra.mxu0 0.0
          %382 = vmatprep.subr.mxu0 0.0
          %383 = vmatpush1.msra.mxu0 0.0
          %384 = vmatprep.subr.mxu0 0.0
          %385 = vmatpush1.msra.mxu0 0.0
          %386 = vmatprep.subr.mxu0 0.0
          %387 = vmatpush1.msra.mxu0 0.0
          %388 = vmatprep.subr.mxu0 0.0
          %389 = vmatpush1.msra.mxu0 0.0
          %390 = vmatprep.subr.mxu0 0.0
          %391 = vmatpush1.msra.mxu0 0.0
          %392 = vmatprep.subr.mxu0 0.0
          %393 = vmatpush1.msra.mxu0 0.0
          %394 = vmatprep.subr.mxu0 0.0
          %395 = vmatpush1.msra.mxu0 0.0
          %396 = vmatprep.subr.mxu0 0.0
          %397 = vmatpush1.msra.mxu0 0.0
          %398 = vmatprep.subr.mxu0 0.0
          %399 = vmatpush1.msra.mxu0 0.0
          %400 = vmatprep.subr.mxu0 0.0
          %401 = vmatpush1.msra.mxu0 0.0
          %402 = vmatprep.subr.mxu0 0.0
          %403 = vmatpush1.msra.mxu0 0.0
          %404 = vmatprep.subr.mxu0 0.0
          %405 = vmatpush1.msra.mxu0 0.0
          %406 = vmatprep.subr.mxu0 0.0
          %407 = vmatpush1.msra.mxu0 0.0
          %408 = vmatprep.subr.mxu0 0.0
          %409 = vmatpush1.msra.mxu0 0.0
          %410 = vmatprep.subr.mxu0 0.0
          %411 = vmatpush1.msra.mxu0 %v378
          %412 = vmatprep.subr.mxu0 0.0
          %413 = vmatpush2.msra.mxu0 0.0
          %414 = vmatprep.subr.mxu0 0.0
          %415 = vmatpush2.msra.mxu0 0.0
          %416 = vmatprep.subr.mxu0 0.0
          %417 = vmatpush2.msra.mxu0 0.0
          %418 = vmatprep.subr.mxu0 0.0
          %419 = vmatpush2.msra.mxu0 0.0
          %420 = vmatprep.subr.mxu0 0.0
          %421 = vmatpush2.msra.mxu0 0.0
          %422 = vmatprep.subr.mxu0 0.0
          %423 = vmatpush2.msra.mxu0 0.0
          %424 = vmatprep.subr.mxu0 0.0
          %425 = vmatpush2.msra.mxu0 0.0
          %426 = vmatprep.subr.mxu0 0.0
          %427 = vmatpush2.msra.mxu0 0.0
          %428 = vmatprep.subr.mxu0 0.0
          %429 = vmatpush2.msra.mxu0 0.0
          %430 = vmatprep.subr.mxu0 0.0
          %431 = vmatpush2.msra.mxu0 0.0
          %432 = vmatprep.subr.mxu0 0.0
          %433 = vmatpush2.msra.mxu0 0.0
          %434 = vmatprep.subr.mxu0 0.0
          %435 = vmatpush2.msra.mxu0 0.0
          %436 = vmatprep.subr.mxu0 0.0
          %437 = vmatpush2.msra.mxu0 0.0
          %438 = vmatprep.subr.mxu0 0.0
          %439 = vmatpush2.msra.mxu0 0.0
          %440 = vmatprep.subr.mxu0 0.0
          %441 = vmatpush2.msra.mxu0 0.0
          %442 = vmatprep.subr.mxu0 0.0
          %443 = vmatpush2.msra.mxu0 0.0
          %444 = vmatprep.mubr.f32.mxu0 0.0
          %445 = vmatmul.mubr.f32.gmra.mxu0 %v375
          %v446 = vpop.f32.mrf.mxu0
          %v447 = vadd.f32 0.0, %v446
          %v448 = vpop.f32.mrf.mxu0
          %449 = vdwg.mxu0
          %v450 = vmax.f32 %v447, 0.0
          %v451 = vld [vmem:[%s4] sm:$0xf]
          %vm452 = vcmask 15360
          %v454 = vsel %vm452, %v451, 0
          %vm456 = vcmask 1041408
          %v458 = vsel %vm456, %v450, 0
          %460 = vmatprep.subr.mxu0 0.0
          %461 = vmatpush1.msra.mxu0 0.0
          %462 = vmatprep.subr.mxu0 0.0
          %463 = vmatpush1.msra.mxu0 0.0
          %464 = vmatprep.subr.mxu0 0.0
          %465 = vmatpush1.msra.mxu0 0.0
          %466 = vmatprep.subr.mxu0 0.0
          %467 = vmatpush1.msra.mxu0 0.0
          %468 = vmatprep.subr.mxu0 0.0
          %469 = vmatpush1.msra.mxu0 0.0
          %470 = vmatprep.subr.mxu0 0.0
          %471 = vmatpush1.msra.mxu0 0.0
          %472 = vmatprep.subr.mxu0 0.0
          %473 = vmatpush1.msra.mxu0 0.0
          %474 = vmatprep.subr.mxu0 0.0
          %475 = vmatpush1.msra.mxu0 0.0
          %476 = vmatprep.subr.mxu0 0.0
          %477 = vmatpush1.msra.mxu0 0.0
          %478 = vmatprep.subr.mxu0 0.0
          %479 = vmatpush1.msra.mxu0 0.0
          %480 = vmatprep.subr.mxu0 0.0
          %481 = vmatpush1.msra.mxu0 0.0
          %482 = vmatprep.subr.mxu0 0.0
          %483 = vmatpush1.msra.mxu0 0.0
          %484 = vmatprep.subr.mxu0 0.0
          %485 = vmatpush1.msra.mxu0 0.0
          %486 = vmatprep.subr.mxu0 0.0
          %487 = vmatpush1.msra.mxu0 0.0
          %488 = vmatprep.subr.mxu0 0.0
          %489 = vmatpush1.msra.mxu0 0.0
          %490 = vmatprep.subr.mxu0 0.0
          %491 = vmatpush1.msra.mxu0 %v458
          %492 = vmatprep.subr.mxu0 0.0
          %493 = vmatpush2.msra.mxu0 0.0
          %494 = vmatprep.subr.mxu0 0.0
          %495 = vmatpush2.msra.mxu0 0.0
          %496 = vmatprep.subr.mxu0 0.0
          %497 = vmatpush2.msra.mxu0 0.0
          %498 = vmatprep.subr.mxu0 0.0
          %499 = vmatpush2.msra.mxu0 0.0
          %500 = vmatprep.subr.mxu0 0.0
          %501 = vmatpush2.msra.mxu0 0.0
          %502 = vmatprep.subr.mxu0 0.0
          %503 = vmatpush2.msra.mxu0 0.0
          %504 = vmatprep.subr.mxu0 0.0
          %505 = vmatpush2.msra.mxu0 0.0
          %506 = vmatprep.subr.mxu0 0.0
          %507 = vmatpush2.msra.mxu0 0.0
          %508 = vmatprep.subr.mxu0 0.0
          %509 = vmatpush2.msra.mxu0 0.0
          %510 = vmatprep.subr.mxu0 0.0
          %511 = vmatpush2.msra.mxu0 0.0
          %512 = vmatprep.subr.mxu0 0.0
          %513 = vmatpush2.msra.mxu0 0.0
          %514 = vmatprep.subr.mxu0 0.0
          %515 = vmatpush2.msra.mxu0 0.0
          %516 = vmatprep.subr.mxu0 0.0
          %517 = vmatpush2.msra.mxu0 0.0
          %518 = vmatprep.subr.mxu0 0.0
          %519 = vmatpush2.msra.mxu0 0.0
          %520 = vmatprep.subr.mxu0 0.0
          %521 = vmatpush2.msra.mxu0 0.0
          %522 = vmatprep.subr.mxu0 0.0
          %523 = vmatpush2.msra.mxu0 0.0
          %524 = vmatprep.mubr.f32.mxu0 0.0
          %525 = vmatmul.mubr.f32.gmra.mxu0 %v454
          %v526 = vpop.f32.mrf.mxu0
          %v527 = vadd.f32 0.0, %v526
          %v528 = vpop.f32.mrf.mxu0
          %529 = vdwg.mxu0
          %v531 = vsel %vm452, %v372, 0
          %v534 = vsel %vm456, %v371, 0
          %536 = vmatprep.subr.mxu0 0.0
          %537 = vmatpush1.msra.mxu0 0.0
          %538 = vmatprep.subr.mxu0 0.0
          %539 = vmatpush1.msra.mxu0 0.0
          %540 = vmatprep.subr.mxu0 0.0
          %541 = vmatpush1.msra.mxu0 0.0
          %542 = vmatprep.subr.mxu0 0.0
          %543 = vmatpush1.msra.mxu0 0.0
          %544 = vmatprep.subr.mxu0 0.0
          %545 = vmatpush1.msra.mxu0 0.0
          %546 = vmatprep.subr.mxu0 0.0
          %547 = vmatpush1.msra.mxu0 0.0
          %548 = vmatprep.subr.mxu0 0.0
          %549 = vmatpush1.msra.mxu0 0.0
          %550 = vmatprep.subr.mxu0 0.0
          %551 = vmatpush1.msra.mxu0 0.0
          %552 = vmatprep.subr.mxu0 0.0
          %553 = vmatpush1.msra.mxu0 0.0
          %554 = vmatprep.subr.mxu0 0.0
          %555 = vmatpush1.msra.mxu0 0.0
          %556 = vmatprep.subr.mxu0 0.0
          %557 = vmatpush1.msra.mxu0 0.0
          %558 = vmatprep.subr.mxu0 0.0
          %559 = vmatpush1.msra.mxu0 0.0
          %560 = vmatprep.subr.mxu0 0.0
          %561 = vmatpush1.msra.mxu0 0.0
          %562 = vmatprep.subr.mxu0 0.0
          %563 = vmatpush1.msra.mxu0 0.0
          %564 = vmatprep.subr.mxu0 0.0
          %565 = vmatpush1.msra.mxu0 0.0
          %566 = vmatprep.subr.mxu0 0.0
          %567 = vmatpush1.msra.mxu0 %v534
          %568 = vmatprep.subr.mxu0 0.0
          %569 = vmatpush2.msra.mxu0 0.0
          %570 = vmatprep.subr.mxu0 0.0
          %571 = vmatpush2.msra.mxu0 0.0
          %572 = vmatprep.subr.mxu0 0.0
          %573 = vmatpush2.msra.mxu0 0.0
          %574 = vmatprep.subr.mxu0 0.0
          %575 = vmatpush2.msra.mxu0 0.0
          %576 = vmatprep.subr.mxu0 0.0
          %577 = vmatpush2.msra.mxu0 0.0
          %578 = vmatprep.subr.mxu0 0.0
          %579 = vmatpush2.msra.mxu0 0.0
          %580 = vmatprep.subr.mxu0 0.0
          %581 = vmatpush2.msra.mxu0 0.0
          %582 = vmatprep.subr.mxu0 0.0
          %583 = vmatpush2.msra.mxu0 0.0
          %584 = vmatprep.subr.mxu0 0.0
          %585 = vmatpush2.msra.mxu0 0.0
          %586 = vmatprep.subr.mxu0 0.0
          %587 = vmatpush2.msra.mxu0 0.0
          %588 = vmatprep.subr.mxu0 0.0
          %589 = vmatpush2.msra.mxu0 0.0
          %590 = vmatprep.subr.mxu0 0.0
          %591 = vmatpush2.msra.mxu0 0.0
          %592 = vmatprep.subr.mxu0 0.0
          %593 = vmatpush2.msra.mxu0 0.0
          %594 = vmatprep.subr.mxu0 0.0
          %595 = vmatpush2.msra.mxu0 0.0
          %596 = vmatprep.subr.mxu0 0.0
          %597 = vmatpush2.msra.mxu0 0.0
          %598 = vmatprep.subr.mxu0 0.0
          %599 = vmatpush2.msra.mxu0 0.0
          %600 = vmatprep.mubr.f32.mxu0 0.0
          %601 = vmatmul.mubr.f32.gmra.mxu0 %v531
          %v602 = vpop.f32.mrf.mxu0
          %v603 = vadd.f32 %v527, %v602
          %v604 = vpop.f32.mrf.mxu0
          %605 = vdwg.mxu0
          %v606 = vxor.u32 %v603, 2147483648
          %v607 = vmul.f32 %v606, 1.442695
          %v608 = vpow.pop %v607
          %v609 = vadd.f32 %v608, 1.0
          %v610 = vrcp.pop %v609
          %v611 = vmul.f32 1.0, %v610
          %612 = vst.msk [vmem:[%s257] sm:$0xf] %vm277, %v611
        $region52: #{tpu_custom_call.1} parent=39 // pred_fallthru
          _
        %p613 = scmp.lt.s32.totalorder %s23, 1
        %s614 = scalar_select %p613, %s23, 1
        %s615 = smul.addr %s614, 4
        %s616 = scalar_lea.vmem %s5, %s615
        // Predicated region
        $region53: #{tpu_custom_call.1} parent=39 // pred_check
          %p617 = pneg %p161
        $region54: #{tpu_custom_call.1} parent=39 // pred_check_branch
          %619 = sbr.rel (%p617) target = $region56
        $region55: #{tpu_custom_call.1} parent=39 // pred_region
          _
        $region56: #{tpu_custom_call.1} parent=39 // pred_fallthru
          _
      $region40: #{tpu_custom_call.1} parent=5 // pred_fallthru
        _
      %p620 = scmp.le.s32.totalorder 2, %s14
      // Predicated region
      $region57: #{tpu_custom_call.1} parent=5 // pred_check
        %p621 = pneg %p620
      $region58: #{tpu_custom_call.1} parent=5 // pred_check_branch
        %623 = sbr.rel (%p621) target = $region60
      $region59: #{tpu_custom_call.1} parent=5 // pred_region
        %s624 = ssub.s32 %s14, 2
        // Predicated region
        $region61: #{tpu_custom_call.1} parent=59 // pred_check
          %p625 = pneg %p167
        $region62: #{tpu_custom_call.1} parent=59 // pred_check_branch
          %627 = sbr.rel (%p625) target = $region64
        $region63: #{tpu_custom_call.1} parent=59 // pred_region
          %p628 = scmp.lt.s32.totalorder %s25, 1
          %s629 = scalar_select %p628, %s25, 1
          %s630 = smul.addr %s629, 4
          %s631 = scalar_lea.vmem %s5, %s630
        $region64: #{tpu_custom_call.1} parent=59 // pred_fallthru
          _
      $region60: #{tpu_custom_call.1} parent=5 // pred_fallthru
        _
    $region6: #{tpu_custom_call.1} parent=1 // loop_footer
      %s18 = sadd.s32 1, %s14
    $region7: #{tpu_custom_call.1} parent=1 // loop_footer_branch
      %13 = sbr.rel target = $region3
    $region8: #{tpu_custom_call.1} parent=1 // loop_exit
      _
    %632 = vsyncpa [#allocation5], 1
    %s633 = scalar_lea.sflag [#allocation5], 1
    %634 = vsyncpa %s633, 1

</llo_original>
